<compile_context>
chip_gen: v7x
topology: tpu7x:2x2x1
jax: 0.10.0
libtpu: 0.0.40
codegen_flags: <defaults>
</compile_context>

<pallas_src>
import functools

import jax
import jax.numpy as jnp
from jax import lax
from jax.experimental import pallas as pl
from jax.experimental.pallas import tpu as pltpu


def _ce_tile_kernel(x_ref, y_ref, out_ref, *, n_valid, tn):
    i = pl.program_id(0)
    x = x_ref[...].astype(jnp.float32)            # (TN, C), f32 compute
    rows, c = x.shape

    # row-wise max and exp-sum (single full-width exp pass; exp -> EUP slot)
    m = jnp.max(x, axis=1, keepdims=True)         # (TN, 1)
    e = jnp.exp(x - m)                            # (TN, C)
    denom = jnp.sum(e, axis=1, keepdims=True)     # (TN, 1)

    # select x[row, y[row]] via iota compare (no gather, no float one-hot)
    classes = lax.broadcasted_iota(jnp.int32, (rows, c), 1)
    x_sel = jnp.sum(jnp.where(classes == y_ref[...], x, 0.0),
                    axis=1, keepdims=True)        # (TN, 1)

    # log(p_y + 1e-7) with p_y = exp(x_sel - m) / denom  (per-row only; keeps
    # the module's epsilon semantics while avoiding full-width div/log)
    p_sel = jnp.exp(x_sel - m) / denom            # (TN, 1)
    logp = jnp.log(p_sel + 1e-7)                  # (TN, 1)

    # mask out padded tail rows
    row = i * tn + lax.broadcasted_iota(jnp.int32, (rows, 1), 0)
    logp = jnp.where(row < n_valid, logp, 0.0)

    partial = jnp.sum(logp)                       # scalar partial sum
    out_ref[...] = jnp.full((1, 8, 128), partial, dtype=jnp.float32)


def _round_up(a, b):
    return ((a + b - 1) // b) * b


def our_cross_entropy(x, y, *, tn=None):
    """x: (N, C) float logits (f32 or bf16), y: (N,) integer labels in [0, C)."""
    n, c = x.shape
    itemsize = jnp.dtype(x.dtype).itemsize
    sub = 16 if itemsize == 2 else 8              # sublane packing (bf16 vs 32-bit)

    if tn is None:
        # keep x's double-buffered tiles well under the scoped-VMEM budget
        # (conservative enough for v7x's smaller VMEM too)
        budget = 8 * 1024 * 1024
        tn = budget // max(1, 2 * c * itemsize)
    tn = max(sub, (int(tn) // sub) * sub)
    tn = min(tn, 512)
    tn = min(tn, _round_up(n, sub))

    n_pad = _round_up(n, tn)
    num_tiles = n_pad // tn

    xp = x if n_pad == n else jnp.pad(x, ((0, n_pad - n), (0, 0)))
    y2 = y.astype(jnp.int32).reshape(n, 1)
    yp = y2 if n_pad == n else jnp.pad(y2, ((0, n_pad - n), (0, 0)))

    kernel = functools.partial(_ce_tile_kernel, n_valid=n, tn=tn)

    partials = pl.pallas_call(
        kernel,
        out_shape=jax.ShapeDtypeStruct((num_tiles, 8, 128), jnp.float32),
        grid_spec=pltpu.PrefetchScalarGridSpec(
            num_scalar_prefetch=0,
            grid=(num_tiles,),
            in_specs=[
                pl.BlockSpec((tn, c), lambda i: (i, 0)),
                pl.BlockSpec((tn, 1), lambda i: (i, 0)),
            ],
            out_specs=pl.BlockSpec((1, 8, 128), lambda i: (i, 0, 0)),
        ),
        compiler_params=pltpu.CompilerParams(
            dimension_semantics=("parallel",),
        ),
    )(xp, yp)

    total = jnp.sum(partials[:, 0, 0])
    return -(total / jnp.float32(n))


def _reference(x, y):
    # pure-JAX reference matching the PyTorch module semantics
    p = jax.nn.softmax(x.astype(jnp.float32), axis=1)
    oh = jax.nn.one_hot(y, x.shape[1], dtype=jnp.float32)
    loss = oh * jnp.log(p + 1e-7)
    return -jnp.mean(jnp.sum(loss, axis=1), axis=0)


if __name__ == "__main__":
    key = jax.random.PRNGKey(0)
    kx, ky = jax.random.split(key)
    N, C = 30, 40
    x = jax.random.normal(kx, (N, C), dtype=jnp.float32)
    # Note: PyTorch's one_hot infers num_classes = max(y)+1; the module only
    # works when max(y) == C-1, so include class C-1 in the labels.
    y = jax.random.randint(ky, (N,), 0, C, dtype=jnp.int32)
    y = y.at[0].set(C - 1)

    ref = _reference(x, y)

    # small tile -> multi-tile grid + padded/masked tail rows exercised
    loss = our_cross_entropy(x, y, tn=8)
    jax.block_until_ready(loss)
    assert jnp.allclose(loss, ref, atol=1e-5, rtol=1e-5), (loss, ref)

    # auto tile-size path (single tile here)
    loss2 = our_cross_entropy(x, y)
    jax.block_until_ready(loss2)
    assert jnp.allclose(loss2, ref, atol=1e-5, rtol=1e-5), (loss2, ref)

    # bf16 logits path (DMA stays bf16, compute in f32)
    xb = x.astype(jnp.bfloat16)
    loss3 = our_cross_entropy(xb, y, tn=16)
    jax.block_until_ready(loss3)
    assert jnp.allclose(loss3, _reference(xb, y), atol=2e-2, rtol=2e-2), (loss3,)

    print("KERNEL_OK")
</pallas_src>

<mosaic_0001>
module attributes {stable_mosaic.version = 11 : i64} {
  func.func @_ce_tile_kernel(%arg0: i32, %arg1: memref<8x40xf32, #tpu.memory_space<vmem>>, %arg2: memref<8x1xi32, #tpu.memory_space<vmem>>, %arg3: memref<1x8x128xf32, #tpu.memory_space<vmem>>) attributes {dimension_semantics = [#tpu.dimension_semantics<parallel>], iteration_bounds = array<i64: 4>, scalar_prefetch = 0 : i64, scratch_operands = 0 : i64, tpu.core_type = #tpu.core_type<tc>, window_params = [{transform_indices = @transform_0, window_bounds = array<i64: 8, 40>}, {transform_indices = @transform_1, window_bounds = array<i64: 8, 1>}, {transform_indices = @transform_2, window_bounds = array<i64: 1, 8, 128>}]} {
    %c0 = arith.constant 0 : index
    %c0_0 = arith.constant 0 : index
    %0 = vector.load %arg1[%c0, %c0_0] : memref<8x40xf32, #tpu.memory_space<vmem>>, vector<8x40xf32>
    %cst = arith.constant dense<0xFF800000> : vector<8xf32>
    %1 = vector.multi_reduction <maximumf>, %0, %cst [1] : vector<8x40xf32> to vector<8xf32>
    %2 = vector.shape_cast %1 : vector<8xf32> to vector<8x1xf32>
    %3 = vector.broadcast %2 : vector<8x1xf32> to vector<8x40xf32>
    %4 = arith.subf %0, %3 : vector<8x40xf32>
    %5 = math.exp %4 : vector<8x40xf32>
    %cst_1 = arith.constant dense<0.000000e+00> : vector<8xf32>
    %6 = vector.multi_reduction <add>, %5, %cst_1 [1] : vector<8x40xf32> to vector<8xf32>
    %7 = vector.shape_cast %6 : vector<8xf32> to vector<8x1xf32>
    %8 = tpu.iota {dimensions = array<i32: 1>} : vector<8x40xi32>
    %c0_2 = arith.constant 0 : index
    %c0_3 = arith.constant 0 : index
    %9 = vector.load %arg2[%c0_2, %c0_3] : memref<8x1xi32, #tpu.memory_space<vmem>>, vector<8x1xi32>
    %10 = vector.broadcast %9 : vector<8x1xi32> to vector<8x40xi32>
    %11 = arith.cmpi eq, %8, %10 : vector<8x40xi32>
    %cst_4 = arith.constant 0.000000e+00 : f32
    %12 = vector.broadcast %cst_4 : f32 to vector<8x40xf32>
    %13 = arith.select %11, %0, %12 : vector<8x40xi1>, vector<8x40xf32>
    %cst_5 = arith.constant dense<0.000000e+00> : vector<8xf32>
    %14 = vector.multi_reduction <add>, %13, %cst_5 [1] : vector<8x40xf32> to vector<8xf32>
    %15 = vector.shape_cast %14 : vector<8xf32> to vector<8x1xf32>
    %16 = arith.subf %15, %2 : vector<8x1xf32>
    %17 = math.exp %16 : vector<8x1xf32>
    %18 = arith.divf %17, %7 : vector<8x1xf32>
    %cst_6 = arith.constant 1.000000e-07 : f32
    %19 = vector.broadcast %cst_6 : f32 to vector<8x1xf32>
    %20 = arith.addf %18, %19 : vector<8x1xf32>
    %21 = math.log %20 : vector<8x1xf32>
    %c8_i32 = arith.constant 8 : i32
    %22 = arith.muli %arg0, %c8_i32 : i32
    %23 = tpu.iota {dimensions = array<i32: 0>} : vector<8x1xi32>
    %24 = vector.broadcast %22 : i32 to vector<8x1xi32>
    %25 = arith.addi %24, %23 : vector<8x1xi32>
    %c30_i32 = arith.constant 30 : i32
    %26 = vector.broadcast %c30_i32 : i32 to vector<8x1xi32>
    %27 = arith.cmpi slt, %25, %26 : vector<8x1xi32>
    %cst_7 = arith.constant 0.000000e+00 : f32
    %28 = vector.broadcast %cst_7 : f32 to vector<8x1xf32>
    %29 = arith.select %27, %21, %28 : vector<8x1xi1>, vector<8x1xf32>
    %30 = vector.shape_cast %29 : vector<8x1xf32> to vector<1x8x1xf32>
    %cst_8 = arith.constant dense<0.000000e+00> : vector<1xf32>
    %31 = vector.multi_reduction <add>, %30, %cst_8 [1, 2] : vector<1x8x1xf32> to vector<1xf32>
    %32 = vector.shape_cast %31 : vector<1xf32> to vector<1x1x1xf32>
    %33 = vector.extract %32[0, 0, 0] : f32 from vector<1x1x1xf32>
    %34 = vector.broadcast %33 : f32 to vector<1x8x128xf32>
    %c0_9 = arith.constant 0 : index
    %c0_10 = arith.constant 0 : index
    %c0_11 = arith.constant 0 : index
    %35 = vector.load %arg3[%c0_9, %c0_10, %c0_11] : memref<1x8x128xf32, #tpu.memory_space<vmem>>, vector<1x8x128xf32>
    tpu.vector_store %arg3[%c0_9, %c0_10, %c0_11], %34 {strides = array<i32>} : memref<1x8x128xf32, #tpu.memory_space<vmem>>, vector<1x8x128xf32>,
    return
  }
  func.func @transform_0(%arg0: i32) -> (i32, i32) {
    %c0_i32 = arith.constant 0 : i32
    %c0_i32_0 = arith.constant 0 : i32
    return %arg0, %c0_i32 : i32, i32
  }
  func.func @transform_1(%arg0: i32) -> (i32, i32) {
    %c0_i32 = arith.constant 0 : i32
    %c0_i32_0 = arith.constant 0 : i32
    return %arg0, %c0_i32 : i32, i32
  }
  func.func @transform_2(%arg0: i32) -> (i32, i32, i32) {
    %c0_i32 = arith.constant 0 : i32
    %c0_i32_0 = arith.constant 0 : i32
    %c0_i32_1 = arith.constant 0 : i32
    return %arg0, %c0_i32, %c0_i32_0 : i32, i32, i32
  }
}

</mosaic_0001>

<llo_original>
// kernel: tpu_custom_call.1
$region0: #{tpu_custom_call.1}
  #allocation0 [shape = 'u32[]', space=smem, size = 0x4, offset = 0x4, fixed_abs, tag = 'smem constant byte address 0x4 - core index']
  #allocation1 [shape = 'u32[144,128]{1,0:T(1,128)}', space=vmem, size = 0x12000, scoped, tag = 'internal scratch']
  %s0 = inlined_call_operand.vmem [shape: f32[32,40], index: 0, kind: input, shape index: {}]
  %s1 = inlined_call_operand.vmem [shape: s32[32,1], index: 1, kind: input, shape index: {}]
  %s2 = inlined_call_operand.hbm [shape: f32[4,8,128], index: 2, kind: output, shape index: {}]
  %s3 = sld [smem:[#allocation0]]
  $region41: #{tpu_custom_call.1} parent=0
    _
  %s5 = ssub.s32 1, %s3
  %s6 = scalar_select 0, %s5, %s3
  $region1: #{tpu_custom_call.1} parent=0
    #allocation2 [shape = 'u8[8192]{0}', space=vmem, size = 0x2000, scoped, tag = 'output window, operand 0']
    #allocation3 [shape = 's32[2]{0}', space=sflag, size = 0x8, scoped, tag = 'scoped memory for tpu_custom_call.1']
    %7 = vsyncpa [#allocation3], 0
    %s8 = scalar_lea.sflag [#allocation3], 1
    %9 = vsyncpa %s8, 0
    loop: start=0, step=1, limit=6
    $region2: #{tpu_custom_call.1} parent=1 // loop_pre_header
      _
    $region3: #{tpu_custom_call.1} parent=1 // loop_header
      %s11 = sphi 0, %s15
      %p12 = scmp.ge.s32.totalorder %s11, 6
      %s21 = sphi 0, %s23
      %s24 = sphi 0, %s21
      %s25 = sphi 0, %s24
      %s41 = sphi 0, %s25
      %s47 = sphi 0, %s49
      %s50 = sphi 0, %s47
      %s51 = sphi 0, %s50
      %s67 = sphi 0, %s51
      %s73 = sphi 0, %s75
      %s76 = sphi 0, %s73
      %s77 = sphi 0, %s76
      %s93 = sphi 0, %s77
    $region4: #{tpu_custom_call.1} parent=1 // loop_header_branch
      %14 = sbr.rel (%p12) target = $region8
    $region5: #{tpu_custom_call.1} parent=1 // loop_body
      %s16 = ssub.s32 %s11, 1
      %s17 = ssub.s32 %s11, 2
      %s18 = sadd.s32 %s11, 1
      %s19 = ssub.s32 %s11, %s18
      %p20 = scmp.eq.s32.totalorder %s19, 0
      %s22 = sadd.s32 %s21, 1
      %s23 = scalar_select %p20, %s21, %s22
      %p26 = pneg %p20
      %p27 = scmp.eq.s32.totalorder %s11, 3
      %p28 = por %p26, %p27
      %p29 = scmp.ne.s32.totalorder %s21, %s24
      %p30 = scmp.eq.s32.totalorder %s11, 0
      %p31 = por %p29, %p30
      %p32 = scmp.ne.s32.totalorder %s21, %s24
      %p33 = scmp.eq.s32.totalorder %s16, 3
      %p34 = por %p32, %p33
      %p35 = scmp.ne.s32.totalorder %s24, %s25
      %p36 = scmp.eq.s32.totalorder %s16, 0
      %p37 = por %p35, %p36
      %p38 = scmp.ne.s32.totalorder %s24, %s25
      %p39 = scmp.eq.s32.totalorder %s17, 3
      %p40 = por %p38, %p39
      %p42 = scmp.ne.s32.totalorder %s25, %s41
      %p43 = scmp.eq.s32.totalorder %s17, 0
      %p44 = por %p42, %p43
      %s45 = ssub.s32 %s11, %s18
      %p46 = scmp.eq.s32.totalorder %s45, 0
      %s48 = sadd.s32 %s47, 1
      %s49 = scalar_select %p46, %s47, %s48
      %p52 = pneg %p46
      %p53 = scmp.eq.s32.totalorder %s11, 3
      %p54 = por %p52, %p53
      %p55 = scmp.ne.s32.totalorder %s47, %s50
      %p56 = scmp.eq.s32.totalorder %s11, 0
      %p57 = por %p55, %p56
      %p58 = scmp.ne.s32.totalorder %s47, %s50
      %p59 = scmp.eq.s32.totalorder %s16, 3
      %p60 = por %p58, %p59
      %p61 = scmp.ne.s32.totalorder %s50, %s51
      %p62 = scmp.eq.s32.totalorder %s16, 0
      %p63 = por %p61, %p62
      %p64 = scmp.ne.s32.totalorder %s50, %s51
      %p65 = scmp.eq.s32.totalorder %s17, 3
      %p66 = por %p64, %p65
      %p68 = scmp.ne.s32.totalorder %s51, %s67
      %p69 = scmp.eq.s32.totalorder %s17, 0
      %p70 = por %p68, %p69
      %s71 = ssub.s32 %s11, %s18
      %p72 = scmp.eq.s32.totalorder %s71, 0
      %s74 = sadd.s32 %s73, 1
      %s75 = scalar_select %p72, %s73, %s74
      %p78 = pneg %p72
      %p79 = scmp.eq.s32.totalorder %s11, 3
      %p80 = por %p78, %p79
      %p81 = scmp.ne.s32.totalorder %s73, %s76
      %p82 = scmp.eq.s32.totalorder %s11, 0
      %p83 = por %p81, %p82
      %p84 = scmp.ne.s32.totalorder %s73, %s76
      %p85 = scmp.eq.s32.totalorder %s16, 3
      %p86 = por %p84, %p85
      %p87 = scmp.ne.s32.totalorder %s76, %s77
      %p88 = scmp.eq.s32.totalorder %s16, 0
      %p89 = por %p87, %p88
      %p90 = scmp.ne.s32.totalorder %s76, %s77
      %p91 = scmp.eq.s32.totalorder %s17, 3
      %p92 = por %p90, %p91
      %p94 = scmp.ne.s32.totalorder %s77, %s93
      %p95 = scmp.eq.s32.totalorder %s17, 0
      %p96 = por %p94, %p95
      %p97 = scmp.le.s32.totalorder 1, %s11
      %p98 = scmp.lt.s32.totalorder %s11, 5
      %p99 = pnand %p97, %p98
      %p100 = pneg %p99
      // Predicated region
      $region9: #{tpu_custom_call.1} parent=5 // pred_check
        _
      $region10: #{tpu_custom_call.1} parent=5 // pred_check_branch
        %102 = sbr.rel (%p99) target = $region12
      $region11: #{tpu_custom_call.1} parent=5 // pred_region
        %s103 = ssub.s32 %s11, 1
      $region12: #{tpu_custom_call.1} parent=5 // pred_fallthru
        _
      %p104 = scmp.lt.s32.totalorder %s11, 4
      // Predicated region
      $region13: #{tpu_custom_call.1} parent=5 // pred_check
        %p105 = pneg %p104
      $region14: #{tpu_custom_call.1} parent=5 // pred_check_branch
        %107 = sbr.rel (%p105) target = $region16
      $region15: #{tpu_custom_call.1} parent=5 // pred_region
        // Predicated region
        $region17: #{tpu_custom_call.1} parent=15 // pred_check
          %p108 = pneg %p31
        $region18: #{tpu_custom_call.1} parent=15 // pred_check_branch
          %110 = sbr.rel (%p108) target = $region20
        $region19: #{tpu_custom_call.1} parent=15 // pred_region
          %p111 = scmp.lt.s32.totalorder %s11, 3
          %s112 = scalar_select %p111, %s11, 3
          %s113 = smul.addr %s112, 8
          %s114 = scalar_lea.vmem %s0, %s113
        $region20: #{tpu_custom_call.1} parent=15 // pred_fallthru
          _
        // Predicated region
        $region21: #{tpu_custom_call.1} parent=15 // pred_check
          %p115 = pneg %p57
        $region22: #{tpu_custom_call.1} parent=15 // pred_check_branch
          %117 = sbr.rel (%p115) target = $region24
        $region23: #{tpu_custom_call.1} parent=15 // pred_region
          %p118 = scmp.lt.s32.totalorder %s11, 3
          %s119 = scalar_select %p118, %s11, 3
          %s120 = smul.addr %s119, 8
          %s121 = scalar_lea.vmem %s1, %s120
        $region24: #{tpu_custom_call.1} parent=15 // pred_fallthru
          _
      $region16: #{tpu_custom_call.1} parent=5 // pred_fallthru
        _
      %p122 = scmp.le.s32.totalorder 1, %s11
      %p123 = scmp.lt.s32.totalorder %s11, 5
      %p124 = pnand %p122, %p123
      %p125 = pneg %p124
      // Predicated region
      $region25: #{tpu_custom_call.1} parent=5 // pred_check
        _
      $region26: #{tpu_custom_call.1} parent=5 // pred_check_branch
        %127 = sbr.rel (%p124) target = $region28
      $region27: #{tpu_custom_call.1} parent=5 // pred_region
        %s128 = ssub.s32 %s11, 1
        %p129 = scmp.lt.s32.totalorder %s16, 3
        %s130 = scalar_select %p129, %s16, 3
        %s131 = smul.addr %s130, 8
        %s132 = scalar_lea.vmem %s0, %s131
        %p133 = pneg %p37
        %p134 = pneg %p34
        %p135 = scmp.lt.s32.totalorder %s16, 3
        %s136 = scalar_select %p135, %s16, 3
        %s137 = smul.addr %s136, 8
        %s138 = scalar_lea.vmem %s1, %s137
        %p139 = pneg %p63
        %p140 = pneg %p60
        %p141 = pneg %p89
        %p142 = pneg %p86
        %s143 = sand.u32 %s76, 1
        %s144 = scalar_lea.sflag [#allocation3], %s143
        %s145 = sand.u32 %s76, 1
        %s146 = smul.addr %s145, 8
        %s147 = scalar_lea.vmem [#allocation2], %s146
        %p148 = scmp.lt.s32.totalorder %s16, 3
        %s149 = scalar_select %p148, %s16, 3
        %s150 = smul.addr %s149, 8
        %s151 = scalar_lea.vmem %s0, %s150
        %p152 = scmp.lt.s32.totalorder %s16, 3
        %s153 = scalar_select %p152, %s16, 3
        %s154 = smul.addr %s153, 8
        %s155 = scalar_lea.vmem %s1, %s154
        %v156 = vld [vmem:[%s151] sm:$0xff]
        %vm157 = vcmask 326656
        %v158 = vsel %vm157, %v156, -inf
        %159 = vmax.xlane.f32.xlu0 %v158
        %v160 = vpop.xlane.xlu0 %159
        %v161 = vsub.f32 %v156, %v160
        %v162 = vmul.f32 %v161, 1.442695
        %v163 = vpow.pop %v162
        %v164 = vsel %vm157, %v163, 0.0
        %165 = vadd.xlane.f32.xlu0 %v164
        %v166 = vpop.xlane.xlu0 %165
        %v167 = vlaneseq
        %v168 = vand.u32 %v167, 127
        %v169 = vld [vmem:[%s155] sm:$0xff]
        %170 = vset.pattern.permute.xlu0 0
        %171 = vperm.xlu0 %170, %v169
        %v172 = vpop.permute.xlu0 %171
        %vm173 = vcmp.eq.s32.totalorder %v168, %v172
        %v174 = vsel %vm173, %v156, 0.0
        %v175 = vsel %vm157, %v174, 0.0
        %176 = vadd.xlane.f32.xlu0 %v175
        %v177 = vpop.xlane.xlu0 %176
        %v178 = vsub.f32 %v177, %v160
        %v179 = vmul.f32 %v178, 1.442695
        %v180 = vpow.pop %v179
        %v181 = vrcp.pop %v166
        %v182 = vmul.f32 %v180, %v181
        %v183 = vadd.f32 %v182, 1e-07
        %v184 = vlog2.pop %v183
        %v185 = vmul.f32 %v184, 0.6931472
        %s186 = smul.u32 %s16, 8
        %v187 = vlaneseq
        %v188 = vshrl.u32 %v187, 7
        %v189 = vstv %s186
        %v190 = vadd.s32 %v189, %v188
        %vm191 = vcmp.lt.s32.totalorder %v190, 30
        %v192 = vsel %vm191, %v185, 0.0
        %vm193 = vcmask 7168
        %v194 = vsel %vm193, %v192, 0.0
        %195 = vadd.xlane.f32.xlu0 %v194
        %v196 = vpop.xlane.xlu0 %195
        %v197 = vrot.slane %v196, 4
        %v198 = vadd.f32 %v196, %v197
        %v199 = vrot.slane %v198, 2
        %v200 = vadd.f32 %v198, %v199
        %v201 = vrot.slane %v200, 1
        %v202 = vadd.f32 %v200, %v201
        %s203 = vtos %v202
        %v204 = vstv %s203
        %205 = vst [vmem:[%s147] sm:$0xff] %v204
        %s206 = sand.u32 %s76, 1
        %s207 = scalar_lea.sflag [#allocation3], %s206
        %s208 = sand.u32 %s76, 1
        %s209 = smul.addr %s208, 8
        %s210 = scalar_lea.vmem [#allocation2], %s209
        // Predicated region
        $region29: #{tpu_custom_call.1} parent=27 // pred_check
          %p211 = pneg %p86
        $region30: #{tpu_custom_call.1} parent=27 // pred_check_branch
          %213 = sbr.rel (%p211) target = $region32
        $region31: #{tpu_custom_call.1} parent=27 // pred_region
          %s215 = ssub.s32 128, 128
          %216 = vsyncadd %s207, %s215
          %s217 = smul.addr %s16, 128
          %s218 = scalar_lea.hbm %s2, %s217
          %s220 = sshll.u32 %s210, 4
          %s221 = int_to_ptr.vmem [resolvable:$true] %s220
          %223 = dma.vmem_to_hbm [thread:$0]  %s221, 128, %s218, %s207
        $region32: #{tpu_custom_call.1} parent=27 // pred_fallthru
          _
      $region28: #{tpu_custom_call.1} parent=5 // pred_fallthru
        _
      %p224 = scmp.le.s32.totalorder 2, %s11
      // Predicated region
      $region33: #{tpu_custom_call.1} parent=5 // pred_check
        %p225 = pneg %p224
      $region34: #{tpu_custom_call.1} parent=5 // pred_check_branch
        %227 = sbr.rel (%p225) target = $region36
      $region35: #{tpu_custom_call.1} parent=5 // pred_region
        %s228 = ssub.s32 %s11, 2
        // Predicated region
        $region37: #{tpu_custom_call.1} parent=35 // pred_check
          %p229 = pneg %p92
        $region38: #{tpu_custom_call.1} parent=35 // pred_check_branch
          %231 = sbr.rel (%p229) target = $region40
        $region39: #{tpu_custom_call.1} parent=35 // pred_region
          %s232 = sand.u32 %s77, 1
          %s233 = scalar_lea.sflag [#allocation3], %s232
          %s234 = sand.u32 %s77, 1
          %s235 = smul.addr %s234, 8
          %s236 = scalar_lea.vmem [#allocation2], %s235
          %237 = dma.done %s233, 128
        $region40: #{tpu_custom_call.1} parent=35 // pred_fallthru
          _
      $region36: #{tpu_custom_call.1} parent=5 // pred_fallthru
        _
    $region6: #{tpu_custom_call.1} parent=1 // loop_footer
      %s15 = sadd.s32 1, %s11
    $region7: #{tpu_custom_call.1} parent=1 // loop_footer_branch
      %10 = sbr.rel target = $region3
    $region8: #{tpu_custom_call.1} parent=1 // loop_exit
      _
    %238 = vsyncpa [#allocation3], 1
    %s239 = scalar_lea.sflag [#allocation3], 1
    %240 = vsyncpa %s239, 1

</llo_original>
